<compile_context>
chip_gen: v7x
topology: tpu7x:2x2x1
jax: 0.10.0
libtpu: 0.0.40
codegen_flags: <defaults>
</compile_context>

<pallas_src>
import functools

import jax
import jax.numpy as jnp
from jax.experimental import pallas as pl
from jax.experimental.pallas import tpu as pltpu

HIDDEN = 256    # embedding dim must be 256 to feed Linear(256, 256)
FC1_OUT = 256
FC2_OUT = 128
MIN_TM = 256    # MXU-friendly minimum row tile
MAX_TM = 1024   # still tiny vs. 32 MiB scoped VMEM (weights ~160 KiB bf16)
VOCAB_ALIGN = 128


def prenet_kernel(ids_ref, ew1_ref, b1_ref, w2_ref, b2_ref, o_ref):
    tm = ids_ref.shape[0]
    vocab_pad = ew1_ref.shape[0]

    # One-hot row select on the MXU.  ew1 already contains E @ W1 (bf16), so
    # this single dot IS embedding-lookup + fc1.
    ids = ids_ref[...]                                              # [tm,1] i32
    iota = jax.lax.broadcasted_iota(jnp.int32, (tm, vocab_pad), 1)  # lane iota
    onehot = (ids == iota).astype(jnp.bfloat16)                     # [tm, Vp]

    # fc1 (+ embedding) + relu   (dropout1 = identity in eval mode)
    h = jnp.dot(onehot, ew1_ref[...],
                preferred_element_type=jnp.float32)                 # [tm,256]
    h = jnp.maximum(h + b1_ref[...], 0.0)

    # fc2 + relu                 (dropout2 = identity in eval mode)
    o = jnp.dot(h.astype(jnp.bfloat16), w2_ref[...],
                preferred_element_type=jnp.float32)                 # [tm,128]
    o_ref[...] = jnp.maximum(o + b2_ref[...], 0.0).astype(o_ref.dtype)
    # TODO(synk): training-mode Dropout(0.5) would need pltpu.prng_* here; it
    # cannot reproduce PyTorch's RNG stream, so eval-mode (identity) is used.


def _choose_tm(n):
    """Largest MXU-aligned row tile (<=1024) that still leaves >= 2 grid
    steps when there is enough work, so v7x's two TensorCores both run."""
    if n >= 2 * MAX_TM:
        return MAX_TM
    half = (n + 1) // 2
    tm = ((half + MIN_TM - 1) // MIN_TM) * MIN_TM
    return max(MIN_TM, min(MAX_TM, tm))


@functools.partial(jax.jit, static_argnames=("tm",))
def _prenet_apply(token_ids, embedding, w1, b1, w2, b2, *, tm):
    """token_ids: [N] int -> row-padded [N_pad, 128] bf16 activations."""
    n = token_ids.shape[0]
    n_pad = pl.cdiv(n, tm) * tm
    # Only the tiny id vector is padded (4 bytes/row) — never full activations.
    ids = jnp.pad(token_ids.astype(jnp.int32), (0, n_pad - n)).reshape(n_pad, 1)

    # Fold embedding into fc1: ew1 = E @ W1 (f32 product, bf16 storage).
    ew1 = (embedding.astype(jnp.float32) @ w1.astype(jnp.float32)
           ).astype(jnp.bfloat16)                                   # [V, 256]
    vocab = embedding.shape[0]
    vocab_pad = pl.cdiv(vocab, VOCAB_ALIGN) * VOCAB_ALIGN
    ew1 = jnp.pad(ew1, ((0, vocab_pad - vocab), (0, 0)))  # zero rows -> +0

    w2_bf = w2.astype(jnp.bfloat16)
    b1_f = b1.astype(jnp.float32).reshape(1, FC1_OUT)
    b2_f = b2.astype(jnp.float32).reshape(1, FC2_OUT)

    return pl.pallas_call(
        prenet_kernel,
        out_shape=jax.ShapeDtypeStruct((n_pad, FC2_OUT), jnp.bfloat16),
        grid_spec=pltpu.PrefetchScalarGridSpec(
            num_scalar_prefetch=0,
            grid=(n_pad // tm,),
            in_specs=[
                pl.BlockSpec((tm, 1), lambda i: (i, 0)),               # ids
                pl.BlockSpec((vocab_pad, FC1_OUT), lambda i: (0, 0)),  # E@W1
                pl.BlockSpec((1, FC1_OUT), lambda i: (0, 0)),          # b1
                pl.BlockSpec((FC1_OUT, FC2_OUT), lambda i: (0, 0)),    # w2
                pl.BlockSpec((1, FC2_OUT), lambda i: (0, 0)),          # b2
            ],
            out_specs=pl.BlockSpec((tm, FC2_OUT), lambda i: (i, 0)),
        ),
        compiler_params=pltpu.CompilerParams(
            dimension_semantics=("parallel",)),
    )(ids, ew1, b1_f, w2_bf, b2_f)


def prenet_apply(token_ids, params):
    tm = _choose_tm(int(token_ids.shape[0]))
    return _prenet_apply(token_ids, params["embedding"], params["w1"],
                         params["b1"], params["w2"], params["b2"], tm=tm)


def pad_sequence(seqs, padding_value=0):
    """PyTorch nn.utils.rnn.pad_sequence (batch_first=False): [T_max, B]."""
    t_max = max(int(s.shape[0]) for s in seqs)
    cols = [jnp.pad(s, (0, t_max - s.shape[0]), constant_values=padding_value)
            for s in seqs]
    return jnp.stack(cols, axis=1)  # [T_max, B]


def prenet_forward(seqs, params):
    tokens = pad_sequence(seqs)                        # [T, B] int32
    t, b = tokens.shape
    out_flat = prenet_apply(tokens.reshape(-1), params)  # [N_pad, 128] bf16
    # NOTE: out_flat is row-padded to the tile size.  The slice below is only
    # to present the [T, B, 128] shape for the demo check — a production
    # consumer that can mask padded rows should use out_flat directly and
    # avoid this extra HBM copy.
    return out_flat[: t * b].reshape(t, b, FC2_OUT)


def prenet_reference(tokens_flat, params):
    """Pure-JAX reference mirroring the kernel's bf16 weight rounding."""
    ew1 = (params["embedding"] @ params["w1"]
           ).astype(jnp.bfloat16).astype(jnp.float32)
    w2 = params["w2"].astype(jnp.bfloat16).astype(jnp.float32)
    h = jnp.maximum(jnp.take(ew1, tokens_flat, axis=0)
                    + params["b1"].reshape(1, -1), 0.0)
    h = h.astype(jnp.bfloat16).astype(jnp.float32)
    return jnp.maximum(h @ w2 + params["b2"].reshape(1, -1), 0.0)


def init_params(key, vocab_size, hidden_size):
    assert hidden_size == HIDDEN
    k_emb, k_w1, k_b1, k_w2, k_b2 = jax.random.split(key, 5)
    bound1 = 1.0 / (HIDDEN ** 0.5)
    bound2 = 1.0 / (FC1_OUT ** 0.5)
    return {
        "embedding": jax.random.normal(k_emb, (vocab_size, hidden_size),
                                       jnp.float32),
        "w1": jax.random.uniform(k_w1, (HIDDEN, FC1_OUT), jnp.float32,
                                 -bound1, bound1),
        "b1": jax.random.uniform(k_b1, (1, FC1_OUT), jnp.float32,
                                 -bound1, bound1),
        "w2": jax.random.uniform(k_w2, (FC1_OUT, FC2_OUT), jnp.float32,
                                 -bound2, bound2),
        "b2": jax.random.uniform(k_b2, (1, FC2_OUT), jnp.float32,
                                 -bound2, bound2),
    }


if __name__ == "__main__":
    key = jax.random.PRNGKey(0)
    vocab_size = 50
    params = init_params(key, vocab_size, HIDDEN)

    # Batch of 2 variable-length token sequences (lengths 5 and 8).
    k1, k2 = jax.random.split(jax.random.PRNGKey(0), 2)
    seqs = [
        jax.random.randint(k1, (5,), 0, vocab_size, jnp.int32),
        jax.random.randint(k2, (8,), 0, vocab_size, jnp.int32),
    ]

    out = prenet_forward(seqs, params)
    out = jax.block_until_ready(out)
    assert out.shape == (8, 2, FC2_OUT), out.shape
    assert bool(jnp.all(out >= 0.0))  # final ReLU

    # Numerical check vs. pure-JAX reference (bf16 MXU / bf16 output path).
    tokens = pad_sequence(seqs)
    ref = prenet_reference(tokens.reshape(-1), params).reshape(8, 2, FC2_OUT)
    err = float(jnp.max(jnp.abs(out.astype(jnp.float32) - ref)))
    assert err < 0.05, f"max abs err {err}"
    print("KERNEL_OK")
</pallas_src>

<mosaic_0001>
module attributes {stable_mosaic.version = 11 : i64} {
  func.func @prenet_kernel(%arg0: i32, %arg1: memref<256x1xi32, #tpu.memory_space<vmem>>, %arg2: memref<128x256xbf16, #tpu.memory_space<vmem>>, %arg3: memref<1x256xf32, #tpu.memory_space<vmem>>, %arg4: memref<256x128xbf16, #tpu.memory_space<vmem>>, %arg5: memref<1x128xf32, #tpu.memory_space<vmem>>, %arg6: memref<256x128xbf16, #tpu.memory_space<vmem>>) attributes {dimension_semantics = [#tpu.dimension_semantics<parallel>], iteration_bounds = array<i64: 1>, scalar_prefetch = 0 : i64, scratch_operands = 0 : i64, tpu.core_type = #tpu.core_type<tc>, window_params = [{transform_indices = @transform_0, window_bounds = array<i64: 256, 1>}, {pipeline_mode = #tpu.pipeline_mode<synchronous>, transform_indices = @transform_1, window_bounds = array<i64: 128, 256>}, {pipeline_mode = #tpu.pipeline_mode<synchronous>, transform_indices = @transform_2, window_bounds = array<i64: 1, 256>}, {pipeline_mode = #tpu.pipeline_mode<synchronous>, transform_indices = @transform_3, window_bounds = array<i64: 256, 128>}, {pipeline_mode = #tpu.pipeline_mode<synchronous>, transform_indices = @transform_4, window_bounds = array<i64: 1, 128>}, {transform_indices = @transform_5, window_bounds = array<i64: 256, 128>}]} {
    %c0 = arith.constant 0 : index
    %c0_0 = arith.constant 0 : index
    %0 = vector.load %arg1[%c0, %c0_0] : memref<256x1xi32, #tpu.memory_space<vmem>>, vector<256x1xi32>
    %1 = tpu.iota {dimensions = array<i32: 1>} : vector<256x128xi32>
    %2 = vector.broadcast %0 : vector<256x1xi32> to vector<256x128xi32>
    %3 = arith.cmpi eq, %2, %1 : vector<256x128xi32>
    %4 = arith.extui %3 : vector<256x128xi1> to vector<256x128xi32>
    %5 = arith.sitofp %4 : vector<256x128xi32> to vector<256x128xf32>
    %6 = arith.truncf %5 : vector<256x128xf32> to vector<256x128xbf16>
    %c0_1 = arith.constant 0 : index
    %c0_2 = arith.constant 0 : index
    %7 = vector.load %arg2[%c0_1, %c0_2] : memref<128x256xbf16, #tpu.memory_space<vmem>>, vector<128x256xbf16>
    %cst = arith.constant dense<0.000000e+00> : vector<256x256xf32>
    %8 = tpu.matmul %6, %7, %cst {dimension_numbers = #tpu.dot_dimension_numbers<[1], [0], [0], [1], [0, 0, 1, 1], [], []>} : vector<256x128xbf16>, vector<128x256xbf16>, vector<256x256xf32> -> vector<256x256xf32>
    %c0_3 = arith.constant 0 : index
    %c0_4 = arith.constant 0 : index
    %9 = vector.load %arg3[%c0_3, %c0_4] : memref<1x256xf32, #tpu.memory_space<vmem>>, vector<1x256xf32>
    %10 = vector.broadcast %9 : vector<1x256xf32> to vector<256x256xf32>
    %11 = arith.addf %8, %10 : vector<256x256xf32>
    %cst_5 = arith.constant 0.000000e+00 : f32
    %12 = vector.broadcast %cst_5 : f32 to vector<256x256xf32>
    %13 = arith.maximumf %11, %12 : vector<256x256xf32>
    %14 = arith.truncf %13 : vector<256x256xf32> to vector<256x256xbf16>
    %c0_6 = arith.constant 0 : index
    %c0_7 = arith.constant 0 : index
    %15 = vector.load %arg4[%c0_6, %c0_7] : memref<256x128xbf16, #tpu.memory_space<vmem>>, vector<256x128xbf16>
    %cst_8 = arith.constant dense<0.000000e+00> : vector<256x128xf32>
    %16 = tpu.matmul %14, %15, %cst_8 {dimension_numbers = #tpu.dot_dimension_numbers<[1], [0], [0], [1], [0, 0, 1, 1], [], []>} : vector<256x256xbf16>, vector<256x128xbf16>, vector<256x128xf32> -> vector<256x128xf32>
    %c0_9 = arith.constant 0 : index
    %c0_10 = arith.constant 0 : index
    %17 = vector.load %arg5[%c0_9, %c0_10] : memref<1x128xf32, #tpu.memory_space<vmem>>, vector<1x128xf32>
    %18 = vector.broadcast %17 : vector<1x128xf32> to vector<256x128xf32>
    %19 = arith.addf %16, %18 : vector<256x128xf32>
    %cst_11 = arith.constant 0.000000e+00 : f32
    %20 = vector.broadcast %cst_11 : f32 to vector<256x128xf32>
    %21 = arith.maximumf %19, %20 : vector<256x128xf32>
    %22 = arith.truncf %21 : vector<256x128xf32> to vector<256x128xbf16>
    %c0_12 = arith.constant 0 : index
    %c0_13 = arith.constant 0 : index
    %23 = vector.load %arg6[%c0_12, %c0_13] : memref<256x128xbf16, #tpu.memory_space<vmem>>, vector<256x128xbf16>
    tpu.vector_store %arg6[%c0_12, %c0_13], %22 {strides = array<i32>} : memref<256x128xbf16, #tpu.memory_space<vmem>>, vector<256x128xbf16>,
    return
  }
  func.func @transform_0(%arg0: i32) -> (i32, i32) {
    %c0_i32 = arith.constant 0 : i32
    %c0_i32_0 = arith.constant 0 : i32
    return %arg0, %c0_i32 : i32, i32
  }
  func.func @transform_1(%arg0: i32) -> (i32, i32) {
    %c0_i32 = arith.constant 0 : i32
    %c0_i32_0 = arith.constant 0 : i32
    %c0_i32_1 = arith.constant 0 : i32
    return %c0_i32, %c0_i32_0 : i32, i32
  }
  func.func @transform_2(%arg0: i32) -> (i32, i32) {
    %c0_i32 = arith.constant 0 : i32
    %c0_i32_0 = arith.constant 0 : i32
    %c0_i32_1 = arith.constant 0 : i32
    return %c0_i32, %c0_i32_0 : i32, i32
  }
  func.func @transform_3(%arg0: i32) -> (i32, i32) {
    %c0_i32 = arith.constant 0 : i32
    %c0_i32_0 = arith.constant 0 : i32
    %c0_i32_1 = arith.constant 0 : i32
    return %c0_i32, %c0_i32_0 : i32, i32
  }
  func.func @transform_4(%arg0: i32) -> (i32, i32) {
    %c0_i32 = arith.constant 0 : i32
    %c0_i32_0 = arith.constant 0 : i32
    %c0_i32_1 = arith.constant 0 : i32
    return %c0_i32, %c0_i32_0 : i32, i32
  }
  func.func @transform_5(%arg0: i32) -> (i32, i32) {
    %c0_i32 = arith.constant 0 : i32
    %c0_i32_0 = arith.constant 0 : i32
    return %arg0, %c0_i32 : i32, i32
  }
}

</mosaic_0001>

<llo_original>
// kernel: _prenet_apply.1
$region0: #{_prenet_apply.1}
  #allocation0 [shape = 'u32[]', space=smem, size = 0x4, offset = 0x4, fixed_abs, tag = 'smem constant byte address 0x4 - core index']
  #allocation1 [shape = 'u32[144,128]{1,0:T(1,128)}', space=vmem, size = 0x12000, scoped, tag = 'internal scratch']
  %s0 = inlined_call_operand.vmem [shape: s32[256,1], index: 0, kind: input, shape index: {}]
  %s1 = inlined_call_operand.vmem [shape: bf16[128,256], index: 1, kind: input, shape index: {}]
  %s2 = inlined_call_operand.vmem [shape: f32[1,256], index: 2, kind: input, shape index: {}]
  %s3 = inlined_call_operand.vmem [shape: bf16[256,128], index: 3, kind: input, shape index: {}]
  %s4 = inlined_call_operand.vmem [shape: f32[1,128], index: 4, kind: input, shape index: {}]
  %s5 = inlined_call_operand.hbm [shape: bf16[256,128], index: 5, kind: output, shape index: {}]
  %s6 = sld [smem:[#allocation0]]
  $region30: #{_prenet_apply.1} parent=0
    _
  %s8 = ssub.s32 1, %s6
  %s9 = scalar_select 0, %s8, %s6
  $region1: #{_prenet_apply.1} parent=0
    #allocation2 [shape = 'u8[65536]{0}', space=vmem, size = 0x10000, scoped, tag = 'output window, operand 0, single buffered']
    #allocation3 [shape = 's32[1]{0}', space=sflag, size = 0x4, scoped, tag = 'scoped memory for _prenet_apply.1']
    %10 = vsyncpa [#allocation3], 0
    // Predicated region
    $region2: #{_prenet_apply.1} parent=1 // pred_check
      _
    $region3: #{_prenet_apply.1} parent=1 // pred_check_branch
      %12 = sbr.rel (0) target = $region5
    $region4: #{_prenet_apply.1} parent=1 // pred_region
      _
    $region5: #{_prenet_apply.1} parent=1 // pred_fallthru
      _
    // Predicated region
    $region6: #{_prenet_apply.1} parent=1 // pred_check
      _
    $region7: #{_prenet_apply.1} parent=1 // pred_check_branch
      %14 = sbr.rel (0) target = $region9
    $region8: #{_prenet_apply.1} parent=1 // pred_region
      _
    $region9: #{_prenet_apply.1} parent=1 // pred_fallthru
      _
    // Predicated region
    $region10: #{_prenet_apply.1} parent=1 // pred_check
      _
    $region11: #{_prenet_apply.1} parent=1 // pred_check_branch
      %16 = sbr.rel (0) target = $region13
    $region12: #{_prenet_apply.1} parent=1 // pred_region
      _
    $region13: #{_prenet_apply.1} parent=1 // pred_fallthru
      _
    // Predicated region
    $region14: #{_prenet_apply.1} parent=1 // pred_check
      _
    $region15: #{_prenet_apply.1} parent=1 // pred_check_branch
      %18 = sbr.rel (0) target = $region17
    $region16: #{_prenet_apply.1} parent=1 // pred_region
      _
    $region17: #{_prenet_apply.1} parent=1 // pred_fallthru
      _
    // Predicated region
    $region18: #{_prenet_apply.1} parent=1 // pred_check
      _
    $region19: #{_prenet_apply.1} parent=1 // pred_check_branch
      %20 = sbr.rel (0) target = $region21
    $region20: #{_prenet_apply.1} parent=1 // pred_region
      _
    $region21: #{_prenet_apply.1} parent=1 // pred_fallthru
      _
    %v22 = vld [vmem:[%s0] sm:$0xff]
    %v23 = vld [vmem:[%s0 + $0x8] sm:$0xff]
    %v24 = vld [vmem:[%s0 + $0x10] sm:$0xff]
    %v25 = vld [vmem:[%s0 + $0x18] sm:$0xff]
    %v26 = vld [vmem:[%s0 + $0x20] sm:$0xff]
    %v27 = vld [vmem:[%s0 + $0x28] sm:$0xff]
    %v28 = vld [vmem:[%s0 + $0x30] sm:$0xff]
    %v29 = vld [vmem:[%s0 + $0x38] sm:$0xff]
    %v30 = vld [vmem:[%s0 + $0x40] sm:$0xff]
    %v31 = vld [vmem:[%s0 + $0x48] sm:$0xff]
    %v32 = vld [vmem:[%s0 + $0x50] sm:$0xff]
    %v33 = vld [vmem:[%s0 + $0x58] sm:$0xff]
    %v34 = vld [vmem:[%s0 + $0x60] sm:$0xff]
    %v35 = vld [vmem:[%s0 + $0x68] sm:$0xff]
    %v36 = vld [vmem:[%s0 + $0x70] sm:$0xff]
    %v37 = vld [vmem:[%s0 + $0x78] sm:$0xff]
    %v38 = vld [vmem:[%s0 + $0x80] sm:$0xff]
    %v39 = vld [vmem:[%s0 + $0x88] sm:$0xff]
    %v40 = vld [vmem:[%s0 + $0x90] sm:$0xff]
    %v41 = vld [vmem:[%s0 + $0x98] sm:$0xff]
    %v42 = vld [vmem:[%s0 + $0xa0] sm:$0xff]
    %v43 = vld [vmem:[%s0 + $0xa8] sm:$0xff]
    %v44 = vld [vmem:[%s0 + $0xb0] sm:$0xff]
    %v45 = vld [vmem:[%s0 + $0xb8] sm:$0xff]
    %v46 = vld [vmem:[%s0 + $0xc0] sm:$0xff]
    %v47 = vld [vmem:[%s0 + $0xc8] sm:$0xff]
    %v48 = vld [vmem:[%s0 + $0xd0] sm:$0xff]
    %v49 = vld [vmem:[%s0 + $0xd8] sm:$0xff]
    %v50 = vld [vmem:[%s0 + $0xe0] sm:$0xff]
    %v51 = vld [vmem:[%s0 + $0xe8] sm:$0xff]
    %v52 = vld [vmem:[%s0 + $0xf0] sm:$0xff]
    %v53 = vld [vmem:[%s0 + $0xf8] sm:$0xff]
    %v54 = vlaneseq
    %v55 = vand.u32 %v54, 127
    %56 = vset.pattern.permute.xlu0 0
    %57 = vperm.xlu0 %56, %v22
    %v58 = vpop.permute.xlu0 %57
    %59 = vset.pattern.permute.xlu0 0
    %60 = vperm.xlu0 %59, %v23
    %v61 = vpop.permute.xlu0 %60
    %62 = vset.pattern.permute.xlu0 0
    %63 = vperm.xlu0 %62, %v24
    %v64 = vpop.permute.xlu0 %63
    %65 = vset.pattern.permute.xlu0 0
    %66 = vperm.xlu0 %65, %v25
    %v67 = vpop.permute.xlu0 %66
    %68 = vset.pattern.permute.xlu0 0
    %69 = vperm.xlu0 %68, %v26
    %v70 = vpop.permute.xlu0 %69
    %71 = vset.pattern.permute.xlu0 0
    %72 = vperm.xlu0 %71, %v27
    %v73 = vpop.permute.xlu0 %72
    %74 = vset.pattern.permute.xlu0 0
    %75 = vperm.xlu0 %74, %v28
    %v76 = vpop.permute.xlu0 %75
    %77 = vset.pattern.permute.xlu0 0
    %78 = vperm.xlu0 %77, %v29
    %v79 = vpop.permute.xlu0 %78
    %80 = vset.pattern.permute.xlu0 0
    %81 = vperm.xlu0 %80, %v30
    %v82 = vpop.permute.xlu0 %81
    %83 = vset.pattern.permute.xlu0 0
    %84 = vperm.xlu0 %83, %v31
    %v85 = vpop.permute.xlu0 %84
    %86 = vset.pattern.permute.xlu0 0
    %87 = vperm.xlu0 %86, %v32
    %v88 = vpop.permute.xlu0 %87
    %89 = vset.pattern.permute.xlu0 0
    %90 = vperm.xlu0 %89, %v33
    %v91 = vpop.permute.xlu0 %90
    %92 = vset.pattern.permute.xlu0 0
    %93 = vperm.xlu0 %92, %v34
    %v94 = vpop.permute.xlu0 %93
    %95 = vset.pattern.permute.xlu0 0
    %96 = vperm.xlu0 %95, %v35
    %v97 = vpop.permute.xlu0 %96
    %98 = vset.pattern.permute.xlu0 0
    %99 = vperm.xlu0 %98, %v36
    %v100 = vpop.permute.xlu0 %99
    %101 = vset.pattern.permute.xlu0 0
    %102 = vperm.xlu0 %101, %v37
    %v103 = vpop.permute.xlu0 %102
    %104 = vset.pattern.permute.xlu0 0
    %105 = vperm.xlu0 %104, %v38
    %v106 = vpop.permute.xlu0 %105
    %107 = vset.pattern.permute.xlu0 0
    %108 = vperm.xlu0 %107, %v39
    %v109 = vpop.permute.xlu0 %108
    %110 = vset.pattern.permute.xlu0 0
    %111 = vperm.xlu0 %110, %v40
    %v112 = vpop.permute.xlu0 %111
    %113 = vset.pattern.permute.xlu0 0
    %114 = vperm.xlu0 %113, %v41
    %v115 = vpop.permute.xlu0 %114
    %116 = vset.pattern.permute.xlu0 0
    %117 = vperm.xlu0 %116, %v42
    %v118 = vpop.permute.xlu0 %117
    %119 = vset.pattern.permute.xlu0 0
    %120 = vperm.xlu0 %119, %v43
    %v121 = vpop.permute.xlu0 %120
    %122 = vset.pattern.permute.xlu0 0
    %123 = vperm.xlu0 %122, %v44
    %v124 = vpop.permute.xlu0 %123
    %125 = vset.pattern.permute.xlu0 0
    %126 = vperm.xlu0 %125, %v45
    %v127 = vpop.permute.xlu0 %126
    %128 = vset.pattern.permute.xlu0 0
    %129 = vperm.xlu0 %128, %v46
    %v130 = vpop.permute.xlu0 %129
    %131 = vset.pattern.permute.xlu0 0
    %132 = vperm.xlu0 %131, %v47
    %v133 = vpop.permute.xlu0 %132
    %134 = vset.pattern.permute.xlu0 0
    %135 = vperm.xlu0 %134, %v48
    %v136 = vpop.permute.xlu0 %135
    %137 = vset.pattern.permute.xlu0 0
    %138 = vperm.xlu0 %137, %v49
    %v139 = vpop.permute.xlu0 %138
    %140 = vset.pattern.permute.xlu0 0
    %141 = vperm.xlu0 %140, %v50
    %v142 = vpop.permute.xlu0 %141
    %143 = vset.pattern.permute.xlu0 0
    %144 = vperm.xlu0 %143, %v51
    %v145 = vpop.permute.xlu0 %144
    %146 = vset.pattern.permute.xlu0 0
    %147 = vperm.xlu0 %146, %v52
    %v148 = vpop.permute.xlu0 %147
    %149 = vset.pattern.permute.xlu0 0
    %150 = vperm.xlu0 %149, %v53
    %v151 = vpop.permute.xlu0 %150
    %vm152 = vcmp.eq.s32.totalorder %v58, %v55
    %vm153 = vcmp.eq.s32.totalorder %v61, %v55
    %vm154 = vcmp.eq.s32.totalorder %v64, %v55
    %vm155 = vcmp.eq.s32.totalorder %v67, %v55
    %vm156 = vcmp.eq.s32.totalorder %v70, %v55
    %vm157 = vcmp.eq.s32.totalorder %v73, %v55
    %vm158 = vcmp.eq.s32.totalorder %v76, %v55
    %vm159 = vcmp.eq.s32.totalorder %v79, %v55
    %vm160 = vcmp.eq.s32.totalorder %v82, %v55
    %vm161 = vcmp.eq.s32.totalorder %v85, %v55
    %vm162 = vcmp.eq.s32.totalorder %v88, %v55
    %vm163 = vcmp.eq.s32.totalorder %v91, %v55
    %vm164 = vcmp.eq.s32.totalorder %v94, %v55
    %vm165 = vcmp.eq.s32.totalorder %v97, %v55
    %vm166 = vcmp.eq.s32.totalorder %v100, %v55
    %vm167 = vcmp.eq.s32.totalorder %v103, %v55
    %vm168 = vcmp.eq.s32.totalorder %v106, %v55
    %vm169 = vcmp.eq.s32.totalorder %v109, %v55
    %vm170 = vcmp.eq.s32.totalorder %v112, %v55
    %vm171 = vcmp.eq.s32.totalorder %v115, %v55
    %vm172 = vcmp.eq.s32.totalorder %v118, %v55
    %vm173 = vcmp.eq.s32.totalorder %v121, %v55
    %vm174 = vcmp.eq.s32.totalorder %v124, %v55
    %vm175 = vcmp.eq.s32.totalorder %v127, %v55
    %vm176 = vcmp.eq.s32.totalorder %v130, %v55
    %vm177 = vcmp.eq.s32.totalorder %v133, %v55
    %vm178 = vcmp.eq.s32.totalorder %v136, %v55
    %vm179 = vcmp.eq.s32.totalorder %v139, %v55
    %vm180 = vcmp.eq.s32.totalorder %v142, %v55
    %vm181 = vcmp.eq.s32.totalorder %v145, %v55
    %vm182 = vcmp.eq.s32.totalorder %v148, %v55
    %vm183 = vcmp.eq.s32.totalorder %v151, %v55
    %v184 = vsel %vm152, 1, 0
    %v185 = vsel %vm153, 1, 0
    %v186 = vsel %vm154, 1, 0
    %v187 = vsel %vm155, 1, 0
    %v188 = vsel %vm156, 1, 0
    %v189 = vsel %vm157, 1, 0
    %v190 = vsel %vm158, 1, 0
    %v191 = vsel %vm159, 1, 0
    %v192 = vsel %vm160, 1, 0
    %v193 = vsel %vm161, 1, 0
    %v194 = vsel %vm162, 1, 0
    %v195 = vsel %vm163, 1, 0
    %v196 = vsel %vm164, 1, 0
    %v197 = vsel %vm165, 1, 0
    %v198 = vsel %vm166, 1, 0
    %v199 = vsel %vm167, 1, 0
    %v200 = vsel %vm168, 1, 0
    %v201 = vsel %vm169, 1, 0
    %v202 = vsel %vm170, 1, 0
    %v203 = vsel %vm171, 1, 0
    %v204 = vsel %vm172, 1, 0
    %v205 = vsel %vm173, 1, 0
    %v206 = vsel %vm174, 1, 0
    %v207 = vsel %vm175, 1, 0
    %v208 = vsel %vm176, 1, 0
    %v209 = vsel %vm177, 1, 0
    %v210 = vsel %vm178, 1, 0
    %v211 = vsel %vm179, 1, 0
    %v212 = vsel %vm180, 1, 0
    %v213 = vsel %vm181, 1, 0
    %v214 = vsel %vm182, 1, 0
    %v215 = vsel %vm183, 1, 0
    %v216 = vcvt.s32.f32 %v184
    %v217 = vcvt.s32.f32 %v185
    %v218 = vcvt.s32.f32 %v186
    %v219 = vcvt.s32.f32 %v187
    %v220 = vcvt.s32.f32 %v188
    %v221 = vcvt.s32.f32 %v189
    %v222 = vcvt.s32.f32 %v190
    %v223 = vcvt.s32.f32 %v191
    %v224 = vcvt.s32.f32 %v192
    %v225 = vcvt.s32.f32 %v193
    %v226 = vcvt.s32.f32 %v194
    %v227 = vcvt.s32.f32 %v195
    %v228 = vcvt.s32.f32 %v196
    %v229 = vcvt.s32.f32 %v197
    %v230 = vcvt.s32.f32 %v198
    %v231 = vcvt.s32.f32 %v199
    %v232 = vcvt.s32.f32 %v200
    %v233 = vcvt.s32.f32 %v201
    %v234 = vcvt.s32.f32 %v202
    %v235 = vcvt.s32.f32 %v203
    %v236 = vcvt.s32.f32 %v204
    %v237 = vcvt.s32.f32 %v205
    %v238 = vcvt.s32.f32 %v206
    %v239 = vcvt.s32.f32 %v207
    %v240 = vcvt.s32.f32 %v208
    %v241 = vcvt.s32.f32 %v209
    %v242 = vcvt.s32.f32 %v210
    %v243 = vcvt.s32.f32 %v211
    %v244 = vcvt.s32.f32 %v212
    %v245 = vcvt.s32.f32 %v213
    %v246 = vcvt.s32.f32 %v214
    %v247 = vcvt.s32.f32 %v215
    %v248 = vpack.c.bf16 %v217, %v216
    %v249 = vpack.c.bf16 %v219, %v218
    %v250 = vpack.c.bf16 %v221, %v220
    %v251 = vpack.c.bf16 %v223, %v222
    %v252 = vpack.c.bf16 %v225, %v224
    %v253 = vpack.c.bf16 %v227, %v226
    %v254 = vpack.c.bf16 %v229, %v228
    %v255 = vpack.c.bf16 %v231, %v230
    %v256 = vpack.c.bf16 %v233, %v232
    %v257 = vpack.c.bf16 %v235, %v234
    %v258 = vpack.c.bf16 %v237, %v236
    %v259 = vpack.c.bf16 %v239, %v238
    %v260 = vpack.c.bf16 %v241, %v240
    %v261 = vpack.c.bf16 %v243, %v242
    %v262 = vpack.c.bf16 %v245, %v244
    %v263 = vpack.c.bf16 %v247, %v246
    %v264 = vld [vmem:[%s1] sm:$0xff]
    %v265 = vld [vmem:[%s1 + $0x8] sm:$0xff]
    %v266 = vld [vmem:[%s1 + $0x10] sm:$0xff]
    %v267 = vld [vmem:[%s1 + $0x18] sm:$0xff]
    %v268 = vld [vmem:[%s1 + $0x20] sm:$0xff]
    %v269 = vld [vmem:[%s1 + $0x28] sm:$0xff]
    %v270 = vld [vmem:[%s1 + $0x30] sm:$0xff]
    %v271 = vld [vmem:[%s1 + $0x38] sm:$0xff]
    %v272 = vld [vmem:[%s1 + $0x40] sm:$0xff]
    %v273 = vld [vmem:[%s1 + $0x48] sm:$0xff]
    %v274 = vld [vmem:[%s1 + $0x50] sm:$0xff]
    %v275 = vld [vmem:[%s1 + $0x58] sm:$0xff]
    %v276 = vld [vmem:[%s1 + $0x60] sm:$0xff]
    %v277 = vld [vmem:[%s1 + $0x68] sm:$0xff]
    %v278 = vld [vmem:[%s1 + $0x70] sm:$0xff]
    %v279 = vld [vmem:[%s1 + $0x78] sm:$0xff]
    %v280 = vld [vmem:[%s2] sm:$0x3]
    %v282 = vlaneseq
    %v283 = vshrl.u32 %v282, 7
    %v284 = vsub.s32 0, %v283
    %v285 = vrot.slane %v280, %v284
    %v286 = vlaneseq
    %v287 = vshrl.u32 %v286, 7
    %v288 = vsub.s32 1, %v287
    %v289 = vrot.slane %v280, %v288
    %v308 = vunpack.c.l.b16 %v264
    %v309 = vunpack.c.h.b16 %v264
    %v310 = vunpack.c.l.b16 %v265
    %v311 = vunpack.c.h.b16 %v265
    %v312 = vunpack.c.l.b16 %v266
    %v313 = vunpack.c.h.b16 %v266
    %v314 = vunpack.c.l.b16 %v267
    %v315 = vunpack.c.h.b16 %v267
    %v316 = vunpack.c.l.b16 %v268
    %v317 = vunpack.c.h.b16 %v268
    %v318 = vunpack.c.l.b16 %v269
    %v319 = vunpack.c.h.b16 %v269
    %v320 = vunpack.c.l.b16 %v270
    %v321 = vunpack.c.h.b16 %v270
    %v322 = vunpack.c.l.b16 %v271
    %v323 = vunpack.c.h.b16 %v271
    %v324 = vunpack.c.l.b16 %v272
    %v325 = vunpack.c.h.b16 %v272
    %v326 = vunpack.c.l.b16 %v273
    %v327 = vunpack.c.h.b16 %v273
    %v328 = vunpack.c.l.b16 %v274
    %v329 = vunpack.c.h.b16 %v274
    %v330 = vunpack.c.l.b16 %v275
    %v331 = vunpack.c.h.b16 %v275
    %v332 = vunpack.c.l.b16 %v276
    %v333 = vunpack.c.h.b16 %v276
    %v334 = vunpack.c.l.b16 %v277
    %v335 = vunpack.c.h.b16 %v277
    %v336 = vunpack.c.l.b16 %v278
    %v337 = vunpack.c.h.b16 %v278
    %v338 = vunpack.c.l.b16 %v279
    %v339 = vunpack.c.h.b16 %v279
    %v340 = vpack.c.b16 %v310, %v308
    %v341 = vpack.c.b16 %v311, %v309
    %v342 = vpack.c.b16 %v314, %v312
    %v343 = vpack.c.b16 %v315, %v313
    %v344 = vpack.c.b16 %v318, %v316
    %v345 = vpack.c.b16 %v319, %v317
    %v346 = vpack.c.b16 %v322, %v320
    %v347 = vpack.c.b16 %v323, %v321
    %v348 = vpack.c.b16 %v326, %v324
    %v349 = vpack.c.b16 %v327, %v325
    %v350 = vpack.c.b16 %v330, %v328
    %v351 = vpack.c.b16 %v331, %v329
    %v352 = vpack.c.b16 %v334, %v332
    %v353 = vpack.c.b16 %v335, %v333
    %v354 = vpack.c.b16 %v338, %v336
    %v355 = vpack.c.b16 %v339, %v337
    %372 = vmatprep.subr.bf16.mxu0 %v341
    %373 = vmatpush1.bf16.msra.mxu0 %v340
    %374 = vmatprep.subr.bf16.mxu0 %v343
    %375 = vmatpush1.bf16.msra.mxu0 %v342
    %376 = vmatprep.subr.bf16.mxu0 %v345
    %377 = vmatpush1.bf16.msra.mxu0 %v344
    %378 = vmatprep.subr.bf16.mxu0 %v347
    %379 = vmatpush1.bf16.msra.mxu0 %v346
    %380 = vmatprep.subr.bf16.mxu0 %v349
    %381 = vmatpush1.bf16.msra.mxu0 %v348
    %382 = vmatprep.subr.bf16.mxu0 %v351
    %383 = vmatpush1.bf16.msra.mxu0 %v350
    %384 = vmatprep.subr.bf16.mxu0 %v353
    %385 = vmatpush1.bf16.msra.mxu0 %v352
    %386 = vmatprep.subr.bf16.mxu0 %v355
    %387 = vmatpush1.bf16.msra.mxu0 %v354
    %388 = vmatprep.subr.bf16.mxu0 0
    %389 = vmatpush1.bf16.msra.mxu0 0
    %390 = vmatprep.subr.bf16.mxu0 0
    %391 = vmatpush1.bf16.msra.mxu0 0
    %392 = vmatprep.subr.bf16.mxu0 0
    %393 = vmatpush1.bf16.msra.mxu0 0
    %394 = vmatprep.subr.bf16.mxu0 0
    %395 = vmatpush1.bf16.msra.mxu0 0
    %396 = vmatprep.subr.bf16.mxu0 0
    %397 = vmatpush1.bf16.msra.mxu0 0
    %398 = vmatprep.subr.bf16.mxu0 0
    %399 = vmatpush1.bf16.msra.mxu0 0
    %400 = vmatprep.subr.bf16.mxu0 0
    %401 = vmatpush1.bf16.msra.mxu0 0
    %402 = vmatprep.subr.bf16.mxu0 0
    %403 = vmatpush1.bf16.msra.mxu0 0
    %404 = vmatprep.mubr.bf16.mxu0 0
    %405 = vmatmul.mubr.bf16.gmra.mrb[0].mxu0 %v248
    %v406 = vpop.f32.mrb[0].mxu0
    %v407 = vadd.f32 %v285, %v406
    %v408 = vpop.f32.mrb[0].mxu0
    %v409 = vadd.f32 %v289, %v408
    %v410 = vpop.f32.mrb[0].mxu0
    %v411 = vadd.f32 %v285, %v410
    %v412 = vpop.f32.mrb[0].mxu0
    %v413 = vadd.f32 %v289, %v412
    %414 = vmatprep.mubr.bf16.mxu0 0
    %415 = vmatmul.mubr.bf16.gmra.mrb[0].mxu0 %v249
    %v416 = vpop.f32.mrb[0].mxu0
    %v417 = vadd.f32 %v285, %v416
    %v418 = vpop.f32.mrb[0].mxu0
    %v419 = vadd.f32 %v289, %v418
    %v420 = vpop.f32.mrb[0].mxu0
    %v421 = vadd.f32 %v285, %v420
    %v422 = vpop.f32.mrb[0].mxu0
    %v423 = vadd.f32 %v289, %v422
    %424 = vmatprep.mubr.bf16.mxu0 0
    %425 = vmatmul.mubr.bf16.gmra.mrb[0].mxu0 %v250
    %v426 = vpop.f32.mrb[0].mxu0
    %v427 = vadd.f32 %v285, %v426
    %v428 = vpop.f32.mrb[0].mxu0
    %v429 = vadd.f32 %v289, %v428
    %v430 = vpop.f32.mrb[0].mxu0
    %v431 = vadd.f32 %v285, %v430
    %v432 = vpop.f32.mrb[0].mxu0
    %v433 = vadd.f32 %v289, %v432
    %434 = vmatprep.mubr.bf16.mxu0 0
    %435 = vmatmul.mubr.bf16.gmra.mrb[0].mxu0 %v251
    %v436 = vpop.f32.mrb[0].mxu0
    %v437 = vadd.f32 %v285, %v436
    %v438 = vpop.f32.mrb[0].mxu0
    %v439 = vadd.f32 %v289, %v438
    %v440 = vpop.f32.mrb[0].mxu0
    %v441 = vadd.f32 %v285, %v440
    %v442 = vpop.f32.mrb[0].mxu0
    %v443 = vadd.f32 %v289, %v442
    %444 = vmatprep.mubr.bf16.mxu0 0
    %445 = vmatmul.mubr.bf16.gmra.mrb[0].mxu0 %v252
    %v446 = vpop.f32.mrb[0].mxu0
    %v447 = vadd.f32 %v285, %v446
    %v448 = vpop.f32.mrb[0].mxu0
    %v449 = vadd.f32 %v289, %v448
    %v450 = vpop.f32.mrb[0].mxu0
    %v451 = vadd.f32 %v285, %v450
    %v452 = vpop.f32.mrb[0].mxu0
    %v453 = vadd.f32 %v289, %v452
    %454 = vmatprep.mubr.bf16.mxu0 0
    %455 = vmatmul.mubr.bf16.gmra.mrb[0].mxu0 %v253
    %v456 = vpop.f32.mrb[0].mxu0
    %v457 = vadd.f32 %v285, %v456
    %v458 = vpop.f32.mrb[0].mxu0
    %v459 = vadd.f32 %v289, %v458
    %v460 = vpop.f32.mrb[0].mxu0
    %v461 = vadd.f32 %v285, %v460
    %v462 = vpop.f32.mrb[0].mxu0
    %v463 = vadd.f32 %v289, %v462
    %464 = vmatprep.mubr.bf16.mxu0 0
    %465 = vmatmul.mubr.bf16.gmra.mrb[0].mxu0 %v254
    %v466 = vpop.f32.mrb[0].mxu0
    %v467 = vadd.f32 %v285, %v466
    %v468 = vpop.f32.mrb[0].mxu0
    %v469 = vadd.f32 %v289, %v468
    %v470 = vpop.f32.mrb[0].mxu0
    %v471 = vadd.f32 %v285, %v470
    %v472 = vpop.f32.mrb[0].mxu0
    %v473 = vadd.f32 %v289, %v472
    %474 = vmatprep.mubr.bf16.mxu0 0
    %475 = vmatmul.mubr.bf16.gmra.mrb[0].mxu0 %v255
    %v476 = vpop.f32.mrb[0].mxu0
    %v477 = vadd.f32 %v285, %v476
    %v478 = vpop.f32.mrb[0].mxu0
    %v479 = vadd.f32 %v289, %v478
    %v480 = vpop.f32.mrb[0].mxu0
    %v481 = vadd.f32 %v285, %v480
    %v482 = vpop.f32.mrb[0].mxu0
    %v483 = vadd.f32 %v289, %v482
    %484 = vmatprep.mubr.bf16.mxu0 0
    %485 = vmatmul.mubr.bf16.gmra.mrb[0].mxu0 %v256
    %v486 = vpop.f32.mrb[0].mxu0
    %v487 = vadd.f32 %v285, %v486
    %v488 = vpop.f32.mrb[0].mxu0
    %v489 = vadd.f32 %v289, %v488
    %v490 = vpop.f32.mrb[0].mxu0
    %v491 = vadd.f32 %v285, %v490
    %v492 = vpop.f32.mrb[0].mxu0
    %v493 = vadd.f32 %v289, %v492
    %494 = vmatprep.mubr.bf16.mxu0 0
    %495 = vmatmul.mubr.bf16.gmra.mrb[0].mxu0 %v257
    %v496 = vpop.f32.mrb[0].mxu0
    %v497 = vadd.f32 %v285, %v496
    %v498 = vpop.f32.mrb[0].mxu0
    %v499 = vadd.f32 %v289, %v498
    %v500 = vpop.f32.mrb[0].mxu0
    %v501 = vadd.f32 %v285, %v500
    %v502 = vpop.f32.mrb[0].mxu0
    %v503 = vadd.f32 %v289, %v502
    %504 = vmatprep.mubr.bf16.mxu0 0
    %505 = vmatmul.mubr.bf16.gmra.mrb[0].mxu0 %v258
    %v506 = vpop.f32.mrb[0].mxu0
    %v507 = vadd.f32 %v285, %v506
    %v508 = vpop.f32.mrb[0].mxu0
    %v509 = vadd.f32 %v289, %v508
    %v510 = vpop.f32.mrb[0].mxu0
    %v511 = vadd.f32 %v285, %v510
    %v512 = vpop.f32.mrb[0].mxu0
    %v513 = vadd.f32 %v289, %v512
    %514 = vmatprep.mubr.bf16.mxu0 0
    %515 = vmatmul.mubr.bf16.gmra.mrb[0].mxu0 %v259
    %v516 = vpop.f32.mrb[0].mxu0
    %v517 = vadd.f32 %v285, %v516
    %v518 = vpop.f32.mrb[0].mxu0
    %v519 = vadd.f32 %v289, %v518
    %v520 = vpop.f32.mrb[0].mxu0
    %v521 = vadd.f32 %v285, %v520
    %v522 = vpop.f32.mrb[0].mxu0
    %v523 = vadd.f32 %v289, %v522
    %524 = vmatprep.mubr.bf16.mxu0 0
    %525 = vmatmul.mubr.bf16.gmra.mrb[0].mxu0 %v260
    %v526 = vpop.f32.mrb[0].mxu0
    %v527 = vadd.f32 %v285, %v526
    %v528 = vpop.f32.mrb[0].mxu0
    %v529 = vadd.f32 %v289, %v528
    %v530 = vpop.f32.mrb[0].mxu0
    %v531 = vadd.f32 %v285, %v530
    %v532 = vpop.f32.mrb[0].mxu0
    %v533 = vadd.f32 %v289, %v532
    %534 = vmatprep.mubr.bf16.mxu0 0
    %535 = vmatmul.mubr.bf16.gmra.mrb[0].mxu0 %v261
    %v536 = vpop.f32.mrb[0].mxu0
    %v537 = vadd.f32 %v285, %v536
    %v538 = vpop.f32.mrb[0].mxu0
    %v539 = vadd.f32 %v289, %v538
    %v540 = vpop.f32.mrb[0].mxu0
    %v541 = vadd.f32 %v285, %v540
    %v542 = vpop.f32.mrb[0].mxu0
    %v543 = vadd.f32 %v289, %v542
    %544 = vmatprep.mubr.bf16.mxu0 0
    %545 = vmatmul.mubr.bf16.gmra.mrb[0].mxu0 %v262
    %v546 = vpop.f32.mrb[0].mxu0
    %v547 = vadd.f32 %v285, %v546
    %v548 = vpop.f32.mrb[0].mxu0
    %v549 = vadd.f32 %v289, %v548
    %v550 = vpop.f32.mrb[0].mxu0
    %v551 = vadd.f32 %v285, %v550
    %v552 = vpop.f32.mrb[0].mxu0
    %v553 = vadd.f32 %v289, %v552
    %554 = vmatprep.mubr.bf16.mxu0 0
    %555 = vmatmul.mubr.bf16.gmra.mrb[0].mxu0 %v263
    %v556 = vpop.f32.mrb[0].mxu0
    %v557 = vadd.f32 %v285, %v556
    %v558 = vpop.f32.mrb[0].mxu0
    %v559 = vadd.f32 %v289, %v558
    %v560 = vpop.f32.mrb[0].mxu0
    %v561 = vadd.f32 %v285, %v560
    %v562 = vpop.f32.mrb[0].mxu0
    %v563 = vadd.f32 %v289, %v562
    %564 = vdwg.mxu0
    %v565 = vmax.f32 %v407, 0.0
    %v566 = vmax.f32 %v409, 0.0
    %v567 = vmax.f32 %v411, 0.0
    %v568 = vmax.f32 %v413, 0.0
    %v569 = vmax.f32 %v417, 0.0
    %v570 = vmax.f32 %v419, 0.0
    %v571 = vmax.f32 %v421, 0.0
    %v572 = vmax.f32 %v423, 0.0
    %v573 = vmax.f32 %v427, 0.0
    %v574 = vmax.f32 %v429, 0.0
    %v575 = vmax.f32 %v431, 0.0
    %v576 = vmax.f32 %v433, 0.0
    %v577 = vmax.f32 %v437, 0.0
    %v578 = vmax.f32 %v439, 0.0
    %v579 = vmax.f32 %v441, 0.0
    %v580 = vmax.f32 %v443, 0.0
    %v581 = vmax.f32 %v447, 0.0
    %v582 = vmax.f32 %v449, 0.0
    %v583 = vmax.f32 %v451, 0.0
    %v584 = vmax.f32 %v453, 0.0
    %v585 = vmax.f32 %v457, 0.0
    %v586 = vmax.f32 %v459, 0.0
    %v587 = vmax.f32 %v461, 0.0
    %v588 = vmax.f32 %v463, 0.0
    %v589 = vmax.f32 %v467, 0.0
    %v590 = vmax.f32 %v469, 0.0
    %v591 = vmax.f32 %v471, 0.0
    %v592 = vmax.f32 %v473, 0.0
    %v593 = vmax.f32 %v477, 0.0
    %v594 = vmax.f32 %v479, 0.0
    %v595 = vmax.f32 %v481, 0.0
    %v596 = vmax.f32 %v483, 0.0
    %v597 = vmax.f32 %v487, 0.0
    %v598 = vmax.f32 %v489, 0.0
    %v599 = vmax.f32 %v491, 0.0
    %v600 = vmax.f32 %v493, 0.0
    %v601 = vmax.f32 %v497, 0.0
    %v602 = vmax.f32 %v499, 0.0
    %v603 = vmax.f32 %v501, 0.0
    %v604 = vmax.f32 %v503, 0.0
    %v605 = vmax.f32 %v507, 0.0
    %v606 = vmax.f32 %v509, 0.0
    %v607 = vmax.f32 %v511, 0.0
    %v608 = vmax.f32 %v513, 0.0
    %v609 = vmax.f32 %v517, 0.0
    %v610 = vmax.f32 %v519, 0.0
    %v611 = vmax.f32 %v521, 0.0
    %v612 = vmax.f32 %v523, 0.0
    %v613 = vmax.f32 %v527, 0.0
    %v614 = vmax.f32 %v529, 0.0
    %v615 = vmax.f32 %v531, 0.0
    %v616 = vmax.f32 %v533, 0.0
    %v617 = vmax.f32 %v537, 0.0
    %v618 = vmax.f32 %v539, 0.0
    %v619 = vmax.f32 %v541, 0.0
    %v620 = vmax.f32 %v543, 0.0
    %v621 = vmax.f32 %v547, 0.0
    %v622 = vmax.f32 %v549, 0.0
    %v623 = vmax.f32 %v551, 0.0
    %v624 = vmax.f32 %v553, 0.0
    %v625 = vmax.f32 %v557, 0.0
    %v626 = vmax.f32 %v559, 0.0
    %v627 = vmax.f32 %v561, 0.0
    %v628 = vmax.f32 %v563, 0.0
    %v629 = vpack.c.bf16 %v567, %v565
    %v630 = vpack.c.bf16 %v568, %v566
    %v631 = vpack.c.bf16 %v571, %v569
    %v632 = vpack.c.bf16 %v572, %v570
    %v633 = vpack.c.bf16 %v575, %v573
    %v634 = vpack.c.bf16 %v576, %v574
    %v635 = vpack.c.bf16 %v579, %v577
    %v636 = vpack.c.bf16 %v580, %v578
    %v637 = vpack.c.bf16 %v583, %v581
    %v638 = vpack.c.bf16 %v584, %v582
    %v639 = vpack.c.bf16 %v587, %v585
    %v640 = vpack.c.bf16 %v588, %v586
    %v641 = vpack.c.bf16 %v591, %v589
    %v642 = vpack.c.bf16 %v592, %v590
    %v643 = vpack.c.bf16 %v595, %v593
    %v644 = vpack.c.bf16 %v596, %v594
    %v645 = vpack.c.bf16 %v599, %v597
    %v646 = vpack.c.bf16 %v600, %v598
    %v647 = vpack.c.bf16 %v603, %v601
    %v648 = vpack.c.bf16 %v604, %v602
    %v649 = vpack.c.bf16 %v607, %v605
    %v650 = vpack.c.bf16 %v608, %v606
    %v651 = vpack.c.bf16 %v611, %v609
    %v652 = vpack.c.bf16 %v612, %v610
    %v653 = vpack.c.bf16 %v615, %v613
    %v654 = vpack.c.bf16 %v616, %v614
    %v655 = vpack.c.bf16 %v619, %v617
    %v656 = vpack.c.bf16 %v620, %v618
    %v657 = vpack.c.bf16 %v623, %v621
    %v658 = vpack.c.bf16 %v624, %v622
    %v659 = vpack.c.bf16 %v627, %v625
    %v660 = vpack.c.bf16 %v628, %v626
    %v661 = vld [vmem:[%s3] sm:$0xf]
    %v662 = vld [vmem:[%s3 + $0x4] sm:$0xf]
    %v663 = vld [vmem:[%s3 + $0x8] sm:$0xf]
    %v664 = vld [vmem:[%s3 + $0xc] sm:$0xf]
    %v665 = vld [vmem:[%s3 + $0x10] sm:$0xf]
    %v666 = vld [vmem:[%s3 + $0x14] sm:$0xf]
    %v667 = vld [vmem:[%s3 + $0x18] sm:$0xf]
    %v668 = vld [vmem:[%s3 + $0x1c] sm:$0xf]
    %v669 = vld [vmem:[%s3 + $0x20] sm:$0xf]
    %v670 = vld [vmem:[%s3 + $0x24] sm:$0xf]
    %v671 = vld [vmem:[%s3 + $0x28] sm:$0xf]
    %v672 = vld [vmem:[%s3 + $0x2c] sm:$0xf]
    %v673 = vld [vmem:[%s3 + $0x30] sm:$0xf]
    %v674 = vld [vmem:[%s3 + $0x34] sm:$0xf]
    %v675 = vld [vmem:[%s3 + $0x38] sm:$0xf]
    %v676 = vld [vmem:[%s3 + $0x3c] sm:$0xf]
    %v677 = vld [vmem:[%s3 + $0x40] sm:$0xf]
    %v678 = vld [vmem:[%s3 + $0x44] sm:$0xf]
    %v679 = vld [vmem:[%s3 + $0x48] sm:$0xf]
    %v680 = vld [vmem:[%s3 + $0x4c] sm:$0xf]
    %v681 = vld [vmem:[%s3 + $0x50] sm:$0xf]
    %v682 = vld [vmem:[%s3 + $0x54] sm:$0xf]
    %v683 = vld [vmem:[%s3 + $0x58] sm:$0xf]
    %v684 = vld [vmem:[%s3 + $0x5c] sm:$0xf]
    %v685 = vld [vmem:[%s3 + $0x60] sm:$0xf]
    %v686 = vld [vmem:[%s3 + $0x64] sm:$0xf]
    %v687 = vld [vmem:[%s3 + $0x68] sm:$0xf]
    %v688 = vld [vmem:[%s3 + $0x6c] sm:$0xf]
    %v689 = vld [vmem:[%s3 + $0x70] sm:$0xf]
    %v690 = vld [vmem:[%s3 + $0x74] sm:$0xf]
    %v691 = vld [vmem:[%s3 + $0x78] sm:$0xf]
    %v692 = vld [vmem:[%s3 + $0x7c] sm:$0xf]
    %v693 = vld [vmem:[%s4] sm:$0x1]
    %v695 = vlaneseq
    %v696 = vshrl.u32 %v695, 7
    %v697 = vsub.s32 0, %v696
    %v698 = vrot.slane %v693, %v697
    %v732 = vunpack.c.l.b16 %v661
    %v733 = vunpack.c.l.b16 %v662
    %v734 = vunpack.c.l.b16 %v663
    %v735 = vunpack.c.l.b16 %v664
    %v736 = vunpack.c.l.b16 %v665
    %v737 = vunpack.c.l.b16 %v666
    %v738 = vunpack.c.l.b16 %v667
    %v739 = vunpack.c.l.b16 %v668
    %v740 = vunpack.c.l.b16 %v669
    %v741 = vunpack.c.l.b16 %v670
    %v742 = vunpack.c.l.b16 %v671
    %v743 = vunpack.c.l.b16 %v672
    %v744 = vunpack.c.l.b16 %v673
    %v745 = vunpack.c.l.b16 %v674
    %v746 = vunpack.c.l.b16 %v675
    %v747 = vunpack.c.l.b16 %v676
    %v748 = vunpack.c.l.b16 %v677
    %v749 = vunpack.c.l.b16 %v678
    %v750 = vunpack.c.l.b16 %v679
    %v751 = vunpack.c.l.b16 %v680
    %v752 = vunpack.c.l.b16 %v681
    %v753 = vunpack.c.l.b16 %v682
    %v754 = vunpack.c.l.b16 %v683
    %v755 = vunpack.c.l.b16 %v684
    %v756 = vunpack.c.l.b16 %v685
    %v757 = vunpack.c.l.b16 %v686
    %v758 = vunpack.c.l.b16 %v687
    %v759 = vunpack.c.l.b16 %v688
    %v760 = vunpack.c.l.b16 %v689
    %v761 = vunpack.c.l.b16 %v690
    %v762 = vunpack.c.l.b16 %v691
    %v763 = vunpack.c.l.b16 %v692
    %v764 = vpack.c.b16 %v733, %v732
    %v765 = vpack.c.b16 %v735, %v734
    %v766 = vpack.c.b16 %v737, %v736
    %v767 = vpack.c.b16 %v739, %v738
    %v768 = vpack.c.b16 %v741, %v740
    %v769 = vpack.c.b16 %v743, %v742
    %v770 = vpack.c.b16 %v745, %v744
    %v771 = vpack.c.b16 %v747, %v746
    %v772 = vpack.c.b16 %v749, %v748
    %v773 = vpack.c.b16 %v751, %v750
    %v774 = vpack.c.b16 %v753, %v752
    %v775 = vpack.c.b16 %v755, %v754
    %v776 = vpack.c.b16 %v757, %v756
    %v777 = vpack.c.b16 %v759, %v758
    %v778 = vpack.c.b16 %v761, %v760
    %v779 = vpack.c.b16 %v763, %v762
    %796 = vmatprep.subr.bf16.mxu0 0
    %797 = vmatpush1.bf16.msra.mxu0 %v764
    %798 = vmatprep.subr.bf16.mxu0 0
    %799 = vmatpush1.bf16.msra.mxu0 %v765
    %800 = vmatprep.subr.bf16.mxu0 0
    %801 = vmatpush1.bf16.msra.mxu0 %v766
    %802 = vmatprep.subr.bf16.mxu0 0
    %803 = vmatpush1.bf16.msra.mxu0 %v767
    %804 = vmatprep.subr.bf16.mxu0 0
    %805 = vmatpush1.bf16.msra.mxu0 %v768
    %806 = vmatprep.subr.bf16.mxu0 0
    %807 = vmatpush1.bf16.msra.mxu0 %v769
    %808 = vmatprep.subr.bf16.mxu0 0
    %809 = vmatpush1.bf16.msra.mxu0 %v770
    %810 = vmatprep.subr.bf16.mxu0 0
    %811 = vmatpush1.bf16.msra.mxu0 %v771
    %812 = vmatprep.subr.bf16.mxu0 0
    %813 = vmatpush1.bf16.msra.mxu0 %v772
    %814 = vmatprep.subr.bf16.mxu0 0
    %815 = vmatpush1.bf16.msra.mxu0 %v773
    %816 = vmatprep.subr.bf16.mxu0 0
    %817 = vmatpush1.bf16.msra.mxu0 %v774
    %818 = vmatprep.subr.bf16.mxu0 0
    %819 = vmatpush1.bf16.msra.mxu0 %v775
    %820 = vmatprep.subr.bf16.mxu0 0
    %821 = vmatpush1.bf16.msra.mxu0 %v776
    %822 = vmatprep.subr.bf16.mxu0 0
    %823 = vmatpush1.bf16.msra.mxu0 %v777
    %824 = vmatprep.subr.bf16.mxu0 0
    %825 = vmatpush1.bf16.msra.mxu0 %v778
    %826 = vmatprep.subr.bf16.mxu0 0
    %827 = vmatpush1.bf16.msra.mxu0 %v779
    %828 = vmatprep.mubr.bf16.mxu0 %v630
    %829 = vmatmul.mubr.bf16.gmra.mrb[0].mxu0 %v629
    %v830 = vpop.f32.mrb[0].mxu0
    %v831 = vadd.f32 %v698, %v830
    %v832 = vpop.f32.mrb[0].mxu0
    %v833 = vpop.f32.mrb[0].mxu0
    %v834 = vadd.f32 %v698, %v833
    %v835 = vpop.f32.mrb[0].mxu0
    %836 = vmatprep.mubr.bf16.mxu0 %v632
    %837 = vmatmul.mubr.bf16.gmra.mrb[0].mxu0 %v631
    %v838 = vpop.f32.mrb[0].mxu0
    %v839 = vadd.f32 %v698, %v838
    %v840 = vpop.f32.mrb[0].mxu0
    %v841 = vpop.f32.mrb[0].mxu0
    %v842 = vadd.f32 %v698, %v841
    %v843 = vpop.f32.mrb[0].mxu0
    %844 = vmatprep.mubr.bf16.mxu0 %v634
    %845 = vmatmul.mubr.bf16.gmra.mrb[0].mxu0 %v633
    %v846 = vpop.f32.mrb[0].mxu0
    %v847 = vadd.f32 %v698, %v846
    %v848 = vpop.f32.mrb[0].mxu0
    %v849 = vpop.f32.mrb[0].mxu0
    %v850 = vadd.f32 %v698, %v849
    %v851 = vpop.f32.mrb[0].mxu0
    %852 = vmatprep.mubr.bf16.mxu0 %v636
    %853 = vmatmul.mubr.bf16.gmra.mrb[0].mxu0 %v635
    %v854 = vpop.f32.mrb[0].mxu0
    %v855 = vadd.f32 %v698, %v854
    %v856 = vpop.f32.mrb[0].mxu0
    %v857 = vpop.f32.mrb[0].mxu0
    %v858 = vadd.f32 %v698, %v857
    %v859 = vpop.f32.mrb[0].mxu0
    %860 = vmatprep.mubr.bf16.mxu0 %v638
    %861 = vmatmul.mubr.bf16.gmra.mrb[0].mxu0 %v637
    %v862 = vpop.f32.mrb[0].mxu0
    %v863 = vadd.f32 %v698, %v862
    %v864 = vpop.f32.mrb[0].mxu0
    %v865 = vpop.f32.mrb[0].mxu0
    %v866 = vadd.f32 %v698, %v865
    %v867 = vpop.f32.mrb[0].mxu0
    %868 = vmatprep.mubr.bf16.mxu0 %v640
    %869 = vmatmul.mubr.bf16.gmra.mrb[0].mxu0 %v639
    %v870 = vpop.f32.mrb[0].mxu0
    %v871 = vadd.f32 %v698, %v870
    %v872 = vpop.f32.mrb[0].mxu0
    %v873 = vpop.f32.mrb[0].mxu0
    %v874 = vadd.f32 %v698, %v873
    %v875 = vpop.f32.mrb[0].mxu0
    %876 = vmatprep.mubr.bf16.mxu0 %v642
    %877 = vmatmul.mubr.bf16.gmra.mrb[0].mxu0 %v641
    %v878 = vpop.f32.mrb[0].mxu0
    %v879 = vadd.f32 %v698, %v878
    %v880 = vpop.f32.mrb[0].mxu0
    %v881 = vpop.f32.mrb[0].mxu0
    %v882 = vadd.f32 %v698, %v881
    %v883 = vpop.f32.mrb[0].mxu0
    %884 = vmatprep.mubr.bf16.mxu0 %v644
    %885 = vmatmul.mubr.bf16.gmra.mrb[0].mxu0 %v643
    %v886 = vpop.f32.mrb[0].mxu0
    %v887 = vadd.f32 %v698, %v886
    %v888 = vpop.f32.mrb[0].mxu0
    %v889 = vpop.f32.mrb[0].mxu0
    %v890 = vadd.f32 %v698, %v889
    %v891 = vpop.f32.mrb[0].mxu0
    %892 = vmatprep.mubr.bf16.mxu0 %v646
    %893 = vmatmul.mubr.bf16.gmra.mrb[0].mxu0 %v645
    %v894 = vpop.f32.mrb[0].mxu0
    %v895 = vadd.f32 %v698, %v894
    %v896 = vpop.f32.mrb[0].mxu0
    %v897 = vpop.f32.mrb[0].mxu0
    %v898 = vadd.f32 %v698, %v897
    %v899 = vpop.f32.mrb[0].mxu0
    %900 = vmatprep.mubr.bf16.mxu0 %v648
    %901 = vmatmul.mubr.bf16.gmra.mrb[0].mxu0 %v647
    %v902 = vpop.f32.mrb[0].mxu0
    %v903 = vadd.f32 %v698, %v902
    %v904 = vpop.f32.mrb[0].mxu0
    %v905 = vpop.f32.mrb[0].mxu0
    %v906 = vadd.f32 %v698, %v905
    %v907 = vpop.f32.mrb[0].mxu0
    %908 = vmatprep.mubr.bf16.mxu0 %v650
    %909 = vmatmul.mubr.bf16.gmra.mrb[0].mxu0 %v649
    %v910 = vpop.f32.mrb[0].mxu0
    %v911 = vadd.f32 %v698, %v910
    %v912 = vpop.f32.mrb[0].mxu0
    %v913 = vpop.f32.mrb[0].mxu0
    %v914 = vadd.f32 %v698, %v913
    %v915 = vpop.f32.mrb[0].mxu0
    %916 = vmatprep.mubr.bf16.mxu0 %v652
    %917 = vmatmul.mubr.bf16.gmra.mrb[0].mxu0 %v651
    %v918 = vpop.f32.mrb[0].mxu0
    %v919 = vadd.f32 %v698, %v918
    %v920 = vpop.f32.mrb[0].mxu0
    %v921 = vpop.f32.mrb[0].mxu0
    %v922 = vadd.f32 %v698, %v921
    %v923 = vpop.f32.mrb[0].mxu0
    %924 = vmatprep.mubr.bf16.mxu0 %v654
    %925 = vmatmul.mubr.bf16.gmra.mrb[0].mxu0 %v653
    %v926 = vpop.f32.mrb[0].mxu0
    %v927 = vadd.f32 %v698, %v926
    %v928 = vpop.f32.mrb[0].mxu0
    %v929 = vpop.f32.mrb[0].mxu0
    %v930 = vadd.f32 %v698, %v929
    %v931 = vpop.f32.mrb[0].mxu0
    %932 = vmatprep.mubr.bf16.mxu0 %v656
    %933 = vmatmul.mubr.bf16.gmra.mrb[0].mxu0 %v655
    %v934 = vpop.f32.mrb[0].mxu0
    %v935 = vadd.f32 %v698, %v934
    %v936 = vpop.f32.mrb[0].mxu0
    %v937 = vpop.f32.mrb[0].mxu0
    %v938 = vadd.f32 %v698, %v937
    %v939 = vpop.f32.mrb[0].mxu0
    %940 = vmatprep.mubr.bf16.mxu0 %v658
    %941 = vmatmul.mubr.bf16.gmra.mrb[0].mxu0 %v657
    %v942 = vpop.f32.mrb[0].mxu0
    %v943 = vadd.f32 %v698, %v942
    %v944 = vpop.f32.mrb[0].mxu0
    %v945 = vpop.f32.mrb[0].mxu0
    %v946 = vadd.f32 %v698, %v945
    %v947 = vpop.f32.mrb[0].mxu0
    %948 = vmatprep.mubr.bf16.mxu0 %v660
    %949 = vmatmul.mubr.bf16.gmra.mrb[0].mxu0 %v659
    %v950 = vpop.f32.mrb[0].mxu0
    %v951 = vadd.f32 %v698, %v950
    %v952 = vpop.f32.mrb[0].mxu0
    %v953 = vpop.f32.mrb[0].mxu0
    %v954 = vadd.f32 %v698, %v953
    %v955 = vpop.f32.mrb[0].mxu0
    %956 = vdwg.mxu0
    %v957 = vmax.f32 %v831, 0.0
    %v958 = vmax.f32 %v834, 0.0
    %v959 = vmax.f32 %v839, 0.0
    %v960 = vmax.f32 %v842, 0.0
    %v961 = vmax.f32 %v847, 0.0
    %v962 = vmax.f32 %v850, 0.0
    %v963 = vmax.f32 %v855, 0.0
    %v964 = vmax.f32 %v858, 0.0
    %v965 = vmax.f32 %v863, 0.0
    %v966 = vmax.f32 %v866, 0.0
    %v967 = vmax.f32 %v871, 0.0
    %v968 = vmax.f32 %v874, 0.0
    %v969 = vmax.f32 %v879, 0.0
    %v970 = vmax.f32 %v882, 0.0
    %v971 = vmax.f32 %v887, 0.0
    %v972 = vmax.f32 %v890, 0.0
    %v973 = vmax.f32 %v895, 0.0
    %v974 = vmax.f32 %v898, 0.0
    %v975 = vmax.f32 %v903, 0.0
    %v976 = vmax.f32 %v906, 0.0
    %v977 = vmax.f32 %v911, 0.0
    %v978 = vmax.f32 %v914, 0.0
    %v979 = vmax.f32 %v919, 0.0
    %v980 = vmax.f32 %v922, 0.0
    %v981 = vmax.f32 %v927, 0.0
    %v982 = vmax.f32 %v930, 0.0
    %v983 = vmax.f32 %v935, 0.0
    %v984 = vmax.f32 %v938, 0.0
    %v985 = vmax.f32 %v943, 0.0
    %v986 = vmax.f32 %v946, 0.0
    %v987 = vmax.f32 %v951, 0.0
    %v988 = vmax.f32 %v954, 0.0
    %v989 = vpack.c.bf16 %v958, %v957
    %v990 = vpack.c.bf16 %v960, %v959
    %v991 = vpack.c.bf16 %v962, %v961
    %v992 = vpack.c.bf16 %v964, %v963
    %v993 = vpack.c.bf16 %v966, %v965
    %v994 = vpack.c.bf16 %v968, %v967
    %v995 = vpack.c.bf16 %v970, %v969
    %v996 = vpack.c.bf16 %v972, %v971
    %v997 = vpack.c.bf16 %v974, %v973
    %v998 = vpack.c.bf16 %v976, %v975
    %v999 = vpack.c.bf16 %v978, %v977
    %v1000 = vpack.c.bf16 %v980, %v979
    %v1001 = vpack.c.bf16 %v982, %v981
    %v1002 = vpack.c.bf16 %v984, %v983
    %v1003 = vpack.c.bf16 %v986, %v985
    %v1004 = vpack.c.bf16 %v988, %v987
    %v1021 = vunpack.c.l.b16 %v989
    %v1022 = vunpack.c.h.b16 %v989
    %v1023 = vunpack.c.l.b16 %v990
    %v1024 = vunpack.c.h.b16 %v990
    %v1025 = vunpack.c.l.b16 %v991
    %v1026 = vunpack.c.h.b16 %v991
    %v1027 = vunpack.c.l.b16 %v992
    %v1028 = vunpack.c.h.b16 %v992
    %v1029 = vunpack.c.l.b16 %v993
    %v1030 = vunpack.c.h.b16 %v993
    %v1031 = vunpack.c.l.b16 %v994
    %v1032 = vunpack.c.h.b16 %v994
    %v1033 = vunpack.c.l.b16 %v995
    %v1034 = vunpack.c.h.b16 %v995
    %v1035 = vunpack.c.l.b16 %v996
    %v1036 = vunpack.c.h.b16 %v996
    %v1037 = vunpack.c.l.b16 %v997
    %v1038 = vunpack.c.h.b16 %v997
    %v1039 = vunpack.c.l.b16 %v998
    %v1040 = vunpack.c.h.b16 %v998
    %v1041 = vunpack.c.l.b16 %v999
    %v1042 = vunpack.c.h.b16 %v999
    %v1043 = vunpack.c.l.b16 %v1000
    %v1044 = vunpack.c.h.b16 %v1000
    %v1045 = vunpack.c.l.b16 %v1001
    %v1046 = vunpack.c.h.b16 %v1001
    %v1047 = vunpack.c.l.b16 %v1002
    %v1048 = vunpack.c.h.b16 %v1002
    %v1049 = vunpack.c.l.b16 %v1003
    %v1050 = vunpack.c.h.b16 %v1003
    %v1051 = vunpack.c.l.b16 %v1004
    %v1052 = vunpack.c.h.b16 %v1004
    %v1053 = vpack.c.b16 %v1021, %v1021
    %v1054 = vpack.c.b16 %v1022, %v1022
    %v1055 = vpack.c.b16 %v1023, %v1023
    %v1056 = vpack.c.b16 %v1024, %v1024
    %v1057 = vpack.c.b16 %v1025, %v1025
    %v1058 = vpack.c.b16 %v1026, %v1026
    %v1059 = vpack.c.b16 %v1027, %v1027
    %v1060 = vpack.c.b16 %v1028, %v1028
    %v1061 = vpack.c.b16 %v1029, %v1029
    %v1062 = vpack.c.b16 %v1030, %v1030
    %v1063 = vpack.c.b16 %v1031, %v1031
    %v1064 = vpack.c.b16 %v1032, %v1032
    %v1065 = vpack.c.b16 %v1033, %v1033
    %v1066 = vpack.c.b16 %v1034, %v1034
    %v1067 = vpack.c.b16 %v1035, %v1035
    %v1068 = vpack.c.b16 %v1036, %v1036
    %v1069 = vpack.c.b16 %v1037, %v1037
    %v1070 = vpack.c.b16 %v1038, %v1038
    %v1071 = vpack.c.b16 %v1039, %v1039
    %v1072 = vpack.c.b16 %v1040, %v1040
    %v1073 = vpack.c.b16 %v1041, %v1041
    %v1074 = vpack.c.b16 %v1042, %v1042
    %v1075 = vpack.c.b16 %v1043, %v1043
    %v1076 = vpack.c.b16 %v1044, %v1044
    %v1077 = vpack.c.b16 %v1045, %v1045
    %v1078 = vpack.c.b16 %v1046, %v1046
    %v1079 = vpack.c.b16 %v1047, %v1047
    %v1080 = vpack.c.b16 %v1048, %v1048
    %v1081 = vpack.c.b16 %v1049, %v1049
    %v1082 = vpack.c.b16 %v1050, %v1050
    %v1083 = vpack.c.b16 %v1051, %v1051
    %v1084 = vpack.c.b16 %v1052, %v1052
    %1117 = vst [vmem:[#allocation2] sm:$0xf] %v1053
    %1118 = vst [vmem:[#allocation2 + $0x4] sm:$0xf] %v1054
    %1119 = vst [vmem:[#allocation2 + $0x8] sm:$0xf] %v1055
    %1120 = vst [vmem:[#allocation2 + $0xc] sm:$0xf] %v1056
    %1121 = vst [vmem:[#allocation2 + $0x10] sm:$0xf] %v1057
    %1122 = vst [vmem:[#allocation2 + $0x14] sm:$0xf] %v1058
    %1123 = vst [vmem:[#allocation2 + $0x18] sm:$0xf] %v1059
    %1124 = vst [vmem:[#allocation2 + $0x1c] sm:$0xf] %v1060
    %1125 = vst [vmem:[#allocation2 + $0x20] sm:$0xf] %v1061
    %1126 = vst [vmem:[#allocation2 + $0x24] sm:$0xf] %v1062
    %1127 = vst [vmem:[#allocation2 + $0x28] sm:$0xf] %v1063
    %1128 = vst [vmem:[#allocation2 + $0x2c] sm:$0xf] %v1064
    %1129 = vst [vmem:[#allocation2 + $0x30] sm:$0xf] %v1065
    %1130 = vst [vmem:[#allocation2 + $0x34] sm:$0xf] %v1066
    %1131 = vst [vmem:[#allocation2 + $0x38] sm:$0xf] %v1067
    %1132 = vst [vmem:[#allocation2 + $0x3c] sm:$0xf] %v1068
    %1133 = vst [vmem:[#allocation2 + $0x40] sm:$0xf] %v1069
    %1134 = vst [vmem:[#allocation2 + $0x44] sm:$0xf] %v1070
    %1135 = vst [vmem:[#allocation2 + $0x48] sm:$0xf] %v1071
    %1136 = vst [vmem:[#allocation2 + $0x4c] sm:$0xf] %v1072
    %1137 = vst [vmem:[#allocation2 + $0x50] sm:$0xf] %v1073
    %1138 = vst [vmem:[#allocation2 + $0x54] sm:$0xf] %v1074
    %1139 = vst [vmem:[#allocation2 + $0x58] sm:$0xf] %v1075
    %1140 = vst [vmem:[#allocation2 + $0x5c] sm:$0xf] %v1076
    %1141 = vst [vmem:[#allocation2 + $0x60] sm:$0xf] %v1077
    %1142 = vst [vmem:[#allocation2 + $0x64] sm:$0xf] %v1078
    %1143 = vst [vmem:[#allocation2 + $0x68] sm:$0xf] %v1079
    %1144 = vst [vmem:[#allocation2 + $0x6c] sm:$0xf] %v1080
    %1145 = vst [vmem:[#allocation2 + $0x70] sm:$0xf] %v1081
    %1146 = vst [vmem:[#allocation2 + $0x74] sm:$0xf] %v1082
    %1147 = vst [vmem:[#allocation2 + $0x78] sm:$0xf] %v1083
    %1148 = vst [vmem:[#allocation2 + $0x7c] sm:$0xf] %v1084
    // Predicated region
    $region22: #{_prenet_apply.1} parent=1 // pred_check
      _
    $region23: #{_prenet_apply.1} parent=1 // pred_check_branch
      %1150 = sbr.rel (0) target = $region25
    $region24: #{_prenet_apply.1} parent=1 // pred_region
      %s1152 = ssub.s32 2048, 2048
      %1153 = vsyncadd [#allocation3], %s1152
      %s1154 = sshll.u32 [#allocation2], 4
      %s1155 = int_to_ptr.vmem [resolvable:$true] %s1154
      %1160 = dma.vmem_to_hbm [thread:$0]  %s1155, 2048, %s5, [#allocation3], 64, 64, 4
    $region25: #{_prenet_apply.1} parent=1 // pred_fallthru
      _
    // Predicated region
    $region26: #{_prenet_apply.1} parent=1 // pred_check
      _
    $region27: #{_prenet_apply.1} parent=1 // pred_check_branch
      %1162 = sbr.rel (0) target = $region29
    $region28: #{_prenet_apply.1} parent=1 // pred_region
      %1163 = dma.done [#allocation3], 2048
    $region29: #{_prenet_apply.1} parent=1 // pred_fallthru
      _
    %1164 = vsyncpa [#allocation3], 1

</llo_original>
